<compile_context>
chip_gen: v7x
topology: tpu7x:2x2x1
jax: 0.10.0
libtpu: 0.0.40
codegen_flags: <defaults>
</compile_context>

<pallas_src>
import jax
import jax.numpy as jnp
from jax.experimental import pallas as pl
from jax.experimental.pallas import tpu as pltpu

_MiB = 1024 * 1024


def build_pe(dim: int, h_max: int, w_max: int, dtype=jnp.float32) -> jnp.ndarray:
    """Deterministic 2D positional-encoding table, identical to the PyTorch __init__."""
    assert dim % 4 == 0, "PositionalEncoding2D requires dim divisible by 4"
    # div = exp(-arange(0, dim//2, 2) / dim * log(10000)), shape (L, 1)  (matches PyTorch)
    div = jnp.exp(-jnp.arange(0.0, dim // 2, 2, dtype=jnp.float32)
                  / dim * jnp.log(jnp.float32(10000.0)))[:, None]        # (L, 1)
    h_pos = jnp.arange(0.0, h_max, dtype=jnp.float32)                     # (h_max,)
    w_pos = jnp.arange(0.0, w_max, dtype=jnp.float32)                     # (w_max,)

    sin_h = jnp.sin(h_pos * div)   # (L, h_max)
    cos_h = jnp.cos(h_pos * div)   # (L, h_max)
    sin_w = jnp.sin(w_pos * div)   # (L, w_max)
    cos_w = jnp.cos(w_pos * div)   # (L, w_max)

    pe = jnp.zeros((1, dim, h_max, w_max), dtype=jnp.float32)
    pe = pe.at[:, 0:dim // 2:2, :, :].set(sin_h[None, :, :, None])
    pe = pe.at[:, 1:dim // 2:2, :, :].set(cos_h[None, :, :, None])
    pe = pe.at[:, dim // 2::2, :, :].set(sin_w[None, :, None, :])
    pe = pe.at[:, dim // 2 + 1::2, :, :].set(cos_w[None, :, None, :])
    return pe.astype(dtype)


def pe_for_shape(pe: jnp.ndarray, H: int, W: int, dtype) -> jnp.ndarray:
    """One-time setup glue (NOT on the forward hot path): slice the full table to the
    forward spatial extent and flatten to a lane-dense (1, C*H*W) slab in the model
    dtype.  (In bf16 the add is performed in bf16, a ~1-ulp deviation vs. the f32 torch
    table; this op is bandwidth-bound so we keep pe in x's dtype.)"""
    _, C, h_max, w_max = pe.shape
    assert H <= h_max and W <= w_max, "input spatial extent exceeds PE table"
    return pe[:, :, :H, :W].reshape(1, C * H * W).astype(dtype)


def _add_pe_kernel(x_ref, pe_ref, o_ref):
    # x/o block: (tb, tl); pe block: (1, tl) -> broadcast add over the batch sublanes.
    o_ref[...] = x_ref[...] + pe_ref[...]


def _gen_aware_params():
    """Generation-aware block-size target and VMEM ceiling."""
    vmem_cap = 128 * _MiB
    try:
        info = pltpu.get_tpu_info()
        vmem_cap = int(getattr(info, "vmem_capacity_bytes", vmem_cap))
    except Exception:
        pass
    if vmem_cap <= 64 * _MiB:            # v7x-class: 64 MiB / TC -> leave headroom
        return 2 * _MiB, 48 * _MiB
    return 4 * _MiB, 64 * _MiB           # v5e / v6e: 128 MiB physical


def _pick_tiles(B: int, L: int, itemsize: int, target_bytes: int):
    """Pick (tb, tl): batch tile with dtype-aware sublane granularity, lane tile a
    multiple-of-128 divisor of the flattened axis, maximizing block size <= target."""
    # Lane tile candidates: multiples of 128 that divide L; else full extent (legal).
    lane_divs = [t for t in range(128, L + 1, 128) if L % t == 0] or [L]
    # Batch tile candidates: full B, plus divisors at sublane-packing granularity
    # (8 rows for 32-bit, 16 for bf16, 32 for int8/fp8).
    sub = 8 * max(1, 4 // itemsize)
    b_divs = sorted({B} | {t for t in range(sub, B + 1, sub) if B % t == 0})

    best = None  # (tb*tl, tl, tb) — maximize block, tie-break on lane density
    for tb in b_divs:
        for tl in lane_divs:
            if tb * tl * itemsize <= target_bytes:
                cand = (tb * tl, tl, tb)
                if best is None or cand > best:
                    best = cand
    if best is None:
        return min(b_divs), min(lane_divs)
    return best[2], best[1]


def positional_encoding_2d(x: jnp.ndarray, pe_flat: jnp.ndarray) -> jnp.ndarray:
    """x: (B, C, H, W); pe_flat: (1, C*H*W) already sliced/flattened/cast by pe_for_shape.

    NOTE: x must arrive in row-major (B, C, H, W) layout so the reshape below is a
    zero-cost bitcast; a transposed producer layout would materialize a copy."""
    B, C, H, W = x.shape
    L = C * H * W
    assert pe_flat.shape == (1, L), f"pe_flat shape {pe_flat.shape} != {(1, L)}"
    assert pe_flat.dtype == x.dtype, "pe must be pre-cast to x.dtype (bandwidth-bound op)"

    itemsize = jnp.dtype(x.dtype).itemsize
    target_bytes, vmem_ceiling = _gen_aware_params()
    tb, tl = _pick_tiles(B, L, itemsize, target_bytes)
    num_b, num_l = B // tb, L // tl

    x2 = x.reshape(B, L)   # contiguous -> zero-cost layout plumbing

    block_bytes = tb * tl * itemsize
    # x aliased with out (in-place) + double buffering + pe; generous but bounded budget.
    vmem_limit = int(min(vmem_ceiling, max(32 * _MiB, 8 * block_bytes)))

    cost = pl.CostEstimate(
        flops=B * L,
        transcendentals=0,
        bytes_accessed=(2 * B * L + L) * itemsize,  # read x + write out + read pe once
    )

    out = pl.pallas_call(
        _add_pe_kernel,
        out_shape=jax.ShapeDtypeStruct((B, L), x.dtype),
        grid_spec=pltpu.PrefetchScalarGridSpec(
            num_scalar_prefetch=0,
            # Batch innermost: pe block index constant across consecutive steps -> DMA skipped.
            grid=(num_l, num_b),
            in_specs=[
                pl.BlockSpec((tb, tl), lambda l, b: (b, l)),   # x: streamed per (l, b)
                pl.BlockSpec((1, tl), lambda l, b: (0, l)),    # pe: independent of b
            ],
            out_specs=pl.BlockSpec((tb, tl), lambda l, b: (b, l)),
        ),
        compiler_params=pltpu.CompilerParams(
            # Outer (lane) axis parallel so v7x's 2-TC sharding preserves the pe DMA-skip
            # on each core; inner batch axis stays sequential per core.
            dimension_semantics=("parallel", "arbitrary"),
            vmem_limit_bytes=vmem_limit,
        ),
        cost_estimate=cost,
        input_output_aliases={0: 0},   # in-place add: out aliases x (input 0)
    )(x2, pe_flat)

    return out.reshape(B, C, H, W)


if __name__ == "__main__":
    def run_case(B, C, h_max, w_max, H, W, dtype=jnp.float32):
        key = jax.random.PRNGKey(0)
        x = jax.random.normal(key, (B, C, H, W), dtype=dtype)
        pe_full = build_pe(C, h_max, w_max)                 # __init__-time table
        pe_flat = pe_for_shape(pe_full, H, W, x.dtype)      # one-time setup: (1, C*H*W)
        # Reference computed BEFORE the (aliased) kernel call — same semantics as torch forward.
        ref = x + pe_full[:, :, :H, :W].astype(x.dtype)
        out = jax.block_until_ready(positional_encoding_2d(x, pe_flat))
        assert out.shape == (B, C, H, W)
        assert jnp.allclose(out, ref, atol=1e-6), "mismatch vs reference"

    # Small shapes consistent with the module: dim (=C) divisible by 4, H/W <= h_max/w_max.
    run_case(B=2, C=4, h_max=32, w_max=32, H=16, W=16)   # L = 1024: lane-dense 128-multiple path
    run_case(B=2, C=4, h_max=16, w_max=16, H=7, W=16)    # L = 448: full-extent lane fallback

    print("KERNEL_OK")
</pallas_src>

<mosaic_0001>
module attributes {stable_mosaic.version = 11 : i64} {
  func.func @_add_pe_kernel(%arg0: i32, %arg1: i32, %arg2: memref<2x1024xf32, #tpu.memory_space<vmem>>, %arg3: memref<1x1024xf32, #tpu.memory_space<vmem>>, %arg4: memref<2x1024xf32, #tpu.memory_space<vmem>>) attributes {dimension_semantics = [#tpu.dimension_semantics<parallel>, #tpu.dimension_semantics<arbitrary>], iteration_bounds = array<i64: 1, 1>, scalar_prefetch = 0 : i64, scratch_operands = 0 : i64, tpu.core_type = #tpu.core_type<tc>, window_params = [{transform_indices = @transform_0, window_bounds = array<i64: 2, 1024>}, {transform_indices = @transform_1, window_bounds = array<i64: 1, 1024>}, {transform_indices = @transform_2, window_bounds = array<i64: 2, 1024>}]} {
    %c0 = arith.constant 0 : index
    %c0_0 = arith.constant 0 : index
    %0 = vector.load %arg2[%c0, %c0_0] : memref<2x1024xf32, #tpu.memory_space<vmem>>, vector<2x1024xf32>
    %c0_1 = arith.constant 0 : index
    %c0_2 = arith.constant 0 : index
    %1 = vector.load %arg3[%c0_1, %c0_2] : memref<1x1024xf32, #tpu.memory_space<vmem>>, vector<1x1024xf32>
    %2 = vector.broadcast %1 : vector<1x1024xf32> to vector<2x1024xf32>
    %3 = arith.addf %0, %2 : vector<2x1024xf32>
    %c0_3 = arith.constant 0 : index
    %c0_4 = arith.constant 0 : index
    %4 = vector.load %arg4[%c0_3, %c0_4] : memref<2x1024xf32, #tpu.memory_space<vmem>>, vector<2x1024xf32>
    tpu.vector_store %arg4[%c0_3, %c0_4], %3 {strides = array<i32>} : memref<2x1024xf32, #tpu.memory_space<vmem>>, vector<2x1024xf32>,
    return
  }
  func.func @transform_0(%arg0: i32, %arg1: i32) -> (i32, i32) {
    %c0_i32 = arith.constant 0 : i32
    return %arg1, %arg0 : i32, i32
  }
  func.func @transform_1(%arg0: i32, %arg1: i32) -> (i32, i32) {
    %c0_i32 = arith.constant 0 : i32
    %c0_i32_0 = arith.constant 0 : i32
    return %c0_i32, %arg0 : i32, i32
  }
  func.func @transform_2(%arg0: i32, %arg1: i32) -> (i32, i32) {
    %c0_i32 = arith.constant 0 : i32
    return %arg1, %arg0 : i32, i32
  }
}

</mosaic_0001>

<llo_original>
// kernel: tpu_custom_call.1
$region0: #{tpu_custom_call.1}
  #allocation0 [shape = 'u32[]', space=smem, size = 0x4, offset = 0x4, fixed_abs, tag = 'smem constant byte address 0x4 - core index']
  #allocation1 [shape = 'u32[144,128]{1,0:T(1,128)}', space=vmem, size = 0x12000, scoped, tag = 'internal scratch']
  %s0 = inlined_call_operand.hbm [shape: f32[2,1024], index: 0, kind: input, shape index: {}, may-alias: {0,2}]
  %s1 = inlined_call_operand.vmem [shape: f32[1,1024], index: 1, kind: input, shape index: {}]
  %s2 = inlined_call_operand.hbm [shape: f32[2,1024], index: 2, kind: output, shape index: {}, may-alias: {0,2}]
  %s3 = sld [smem:[#allocation0]]
  $region22: #{tpu_custom_call.1} parent=0
    _
  %s5 = ssub.s32 1, %s3
  %s6 = scalar_select 0, %s5, %s3
  $region1: #{tpu_custom_call.1} parent=0
    #allocation2 [shape = 'u8[8192]{0}', space=vmem, size = 0x2000, scoped, tag = 'input window, operand 0, single buffered']
    #allocation3 [shape = 's32[1]{0}', space=sflag, size = 0x4, scoped, tag = 'scoped memory for tpu_custom_call.1']
    #allocation4 [shape = 's32[1]{0}', space=sflag, size = 0x4, scoped, tag = 'scoped memory for tpu_custom_call.1']
    #allocation5 [shape = 'u8[8192]{0}', space=vmem, size = 0x2000, scoped, tag = 'output window, operand 0, single buffered']
    %7 = vsyncpa [#allocation3], 0
    %8 = vsyncpa [#allocation4], 0
    // Predicated region
    $region2: #{tpu_custom_call.1} parent=1 // pred_check
      _
    $region3: #{tpu_custom_call.1} parent=1 // pred_check_branch
      %10 = sbr.rel (0) target = $region5
    $region4: #{tpu_custom_call.1} parent=1 // pred_region
      %s12 = ssub.s32 256, 256
      %13 = vsyncadd [#allocation3], %s12
      %s15 = sshll.u32 [#allocation2], 4
      %s16 = int_to_ptr.vmem [resolvable:$true] %s15
      %18 = dma.hbm_to_vmem [thread:$0]  %s0, 256, %s16, [#allocation3]
    $region5: #{tpu_custom_call.1} parent=1 // pred_fallthru
      _
    // Predicated region
    $region6: #{tpu_custom_call.1} parent=1 // pred_check
      _
    $region7: #{tpu_custom_call.1} parent=1 // pred_check_branch
      %20 = sbr.rel (0) target = $region9
    $region8: #{tpu_custom_call.1} parent=1 // pred_region
      _
    $region9: #{tpu_custom_call.1} parent=1 // pred_fallthru
      _
    // Predicated region
    $region10: #{tpu_custom_call.1} parent=1 // pred_check
      _
    $region11: #{tpu_custom_call.1} parent=1 // pred_check_branch
      %22 = sbr.rel (0) target = $region13
    $region12: #{tpu_custom_call.1} parent=1 // pred_region
      %23 = dma.done [#allocation3], 256
    $region13: #{tpu_custom_call.1} parent=1 // pred_fallthru
      _
    %v24 = vld [vmem:[#allocation2] sm:$0xff]
    %v25 = vld [vmem:[#allocation2 + $0x8] sm:$0xff]
    %v26 = vld [vmem:[%s1] sm:$0xff]
    %v28 = vlaneseq
    %v29 = vshrl.u32 %v28, 7
    %v30 = vsub.s32 0, %v29
    %v31 = vrot.slane %v26, %v30
    %v32 = vlaneseq
    %v33 = vshrl.u32 %v32, 7
    %v34 = vsub.s32 1, %v33
    %v35 = vrot.slane %v26, %v34
    %v36 = vlaneseq
    %v37 = vshrl.u32 %v36, 7
    %v38 = vsub.s32 2, %v37
    %v39 = vrot.slane %v26, %v38
    %v40 = vlaneseq
    %v41 = vshrl.u32 %v40, 7
    %v42 = vsub.s32 3, %v41
    %v43 = vrot.slane %v26, %v42
    %v44 = vlaneseq
    %v45 = vshrl.u32 %v44, 7
    %v46 = vsub.s32 4, %v45
    %v47 = vrot.slane %v26, %v46
    %v48 = vlaneseq
    %v49 = vshrl.u32 %v48, 7
    %v50 = vsub.s32 5, %v49
    %v51 = vrot.slane %v26, %v50
    %v52 = vlaneseq
    %v53 = vshrl.u32 %v52, 7
    %v54 = vsub.s32 6, %v53
    %v55 = vrot.slane %v26, %v54
    %v56 = vlaneseq
    %v57 = vshrl.u32 %v56, 7
    %v58 = vsub.s32 7, %v57
    %v59 = vrot.slane %v26, %v58
    %v60 = vcombine.low %v31, %v35
    %v61 = vcombine.low %v39, %v43
    %v63 = vunpack.c.l.s4 1983009808
    %v64 = vunpack.c.0.s8 %v63
    %v65 = vlaneseq
    %v66 = vshrl.u32 %v65, 7
    %v67 = vsub.s32 %v64, %v66
    %v68 = vrot.slane %v60, %v67
    %v70 = vunpack.c.l.s4 1983009808
    %v71 = vunpack.c.0.s8 %v70
    %v72 = vlaneseq
    %v73 = vshrl.u32 %v72, 7
    %v74 = vsub.s32 %v71, %v73
    %v75 = vrot.slane %v61, %v74
    %v76 = vcombine.low %v68, %v75
    %v77 = vcombine.low %v47, %v51
    %v78 = vcombine.low %v55, %v59
    %v80 = vunpack.c.l.s4 1983009808
    %v81 = vunpack.c.0.s8 %v80
    %v82 = vlaneseq
    %v83 = vshrl.u32 %v82, 7
    %v84 = vsub.s32 %v81, %v83
    %v85 = vrot.slane %v77, %v84
    %v87 = vunpack.c.l.s4 1983009808
    %v88 = vunpack.c.0.s8 %v87
    %v89 = vlaneseq
    %v90 = vshrl.u32 %v89, 7
    %v91 = vsub.s32 %v88, %v90
    %v92 = vrot.slane %v78, %v91
    %v93 = vcombine.low %v85, %v92
    %v96 = vadd.f32 %v24, %v76
    %v97 = vadd.f32 %v25, %v93
    %98 = vst [vmem:[#allocation5] sm:$0xff] %v96
    %99 = vst [vmem:[#allocation5 + $0x8] sm:$0xff] %v97
    // Predicated region
    $region14: #{tpu_custom_call.1} parent=1 // pred_check
      _
    $region15: #{tpu_custom_call.1} parent=1 // pred_check_branch
      %101 = sbr.rel (0) target = $region17
    $region16: #{tpu_custom_call.1} parent=1 // pred_region
      %s103 = ssub.s32 256, 256
      %104 = vsyncadd [#allocation4], %s103
      %s106 = sshll.u32 [#allocation5], 4
      %s107 = int_to_ptr.vmem [resolvable:$true] %s106
      %109 = dma.vmem_to_hbm [thread:$0]  %s107, 256, %s2, [#allocation4]
    $region17: #{tpu_custom_call.1} parent=1 // pred_fallthru
      _
    // Predicated region
    $region18: #{tpu_custom_call.1} parent=1 // pred_check
      _
    $region19: #{tpu_custom_call.1} parent=1 // pred_check_branch
      %111 = sbr.rel (0) target = $region21
    $region20: #{tpu_custom_call.1} parent=1 // pred_region
      %112 = dma.done [#allocation4], 256
    $region21: #{tpu_custom_call.1} parent=1 // pred_fallthru
      _
    %113 = vsyncpa [#allocation3], 1
    %114 = vsyncpa [#allocation4], 1

</llo_original>
